<compile_context>
chip_gen: v7x
topology: tpu7x:2x2x1
jax: 0.10.0
libtpu: 0.0.40
codegen_flags: <defaults>
</compile_context>

<pallas_src>
import functools

import jax
import jax.numpy as jnp
from jax.experimental import pallas as pl
from jax.experimental.pallas import tpu as pltpu


def _rfe_conv_kernel(x_ref, wh_ref, bh_ref, wv_ref, bv_ref, wp_ref, bp_ref,
                     o_ref, xpad_ref, *, k, s, p, h, w, th):
    """Grid = (batch, H-tile).  Computes `th` output rows of one batch element.

    In-kernel layout is NCHW (W on lanes, rows on sublanes, channels leading).
    """
    c_in = x_ref.shape[1]
    c_out = o_ref.shape[1]
    wpad = w + 2 * p                      # padded input width
    wd = wpad - k + 1                     # dense (stride-1) stage-1 width
    wf = (w + 2 * p - k) // s + 1         # final output width
    r_in = (th - 1) * s + k               # padded input rows needed by this tile
    r2d = (th - 1) * s + 1                # dense stage-2 rows for this tile

    t = pl.program_id(1)

    # ---- Once per batch element: ReLU + zero-pad the plane into a persistent
    #      VMEM scratch (replaces wrapper pad/transpose and in-kernel concat).
    @pl.when(t == 0)
    def _():
        xpad_ref[...] = jnp.zeros_like(xpad_ref)
        xpad_ref[:, p:p + h, p:p + w] = jnp.maximum(x_ref[0], 0).astype(xpad_ref.dtype)

    # Rows of the padded plane covered by this tile (always in bounds because the
    # wrapper picks th dividing Hf).
    row0 = pl.multiple_of(t * (th * s), th * s)
    xw = xpad_ref[:, pl.ds(row0, r_in), :].astype(jnp.float32)     # (c_in, r_in, wpad)

    wh = wh_ref[...].astype(jnp.float32)          # (c_in, 1, k)
    wv = wv_ref[...].astype(jnp.float32)          # (c_in, 1, k)
    wpw = wp_ref[...].astype(jnp.float32)         # (c_out, 1, c_in)

    # ---- Stage 1: depthwise (1, k) conv along W; dense columns, unit-stride taps.
    s1 = xw[:, :, 0:wd] * wh[:, :, 0:1]
    for i in range(1, k):
        s1 = s1 + xw[:, :, i:i + wd] * wh[:, :, i:i + 1]
    s1 = s1 + bh_ref[...].astype(jnp.float32)     # (c_in, 1, 1) broadcast
    # H zero-padding applies to the *biased* conv1 output (PyTorch pads conv2's
    # input), so rows outside the real image must be exactly 0 (not b_h).
    rix = row0 + jax.lax.broadcasted_iota(jnp.int32, (r_in, 1), 0)
    s1 = jnp.where((rix >= p) & (rix < h + p), s1, 0.0)

    # ---- In-kernel W stride: keep only columns j*s before stages 2/3 and the
    #      HBM store (exact 0/1 selection matmul -> guaranteed lowering).
    if s > 1:
        sel_w = (jax.lax.broadcasted_iota(jnp.int32, (wd, wf), 0)
                 == s * jax.lax.broadcasted_iota(jnp.int32, (wd, wf), 1)
                 ).astype(jnp.float32)
        # TODO(synk): for production channel counts replace this per-channel loop
        # with strided VMEM reads (ref[..., pl.ds(i, wf, s)]) or one batched dot.
        s1 = jnp.stack(
            [jnp.dot(s1[c], sel_w, preferred_element_type=jnp.float32)
             for c in range(c_in)])
    # s1: (c_in, r_in, wf)

    # ---- Stage 2: depthwise (k, 1) conv along H; unit-stride row taps.
    s2 = s1[:, 0:r2d, :] * wv[:, :, 0:1]
    for i in range(1, k):
        s2 = s2 + s1[:, i:i + r2d, :] * wv[:, :, i:i + 1]
    s2 = s2 + bv_ref[...].astype(jnp.float32)

    # ---- In-kernel H stride: keep only rows r*s before the 1x1 conv / store.
    if s > 1:
        sel_h = (s * jax.lax.broadcasted_iota(jnp.int32, (th, r2d), 0)
                 == jax.lax.broadcasted_iota(jnp.int32, (th, r2d), 1)
                 ).astype(jnp.float32)
        s2 = jnp.stack(
            [jnp.dot(sel_h, s2[c], preferred_element_type=jnp.float32)
             for c in range(c_in)])
    # s2: (c_in, th, wf)

    # ---- Stage 3: pointwise 1x1.  With tiny channel counts the MXU would be <1%
    #      utilized, so run it as a VPU multiply-add over input channels.
    # TODO(synk): switch to a bf16 MXU matmul for production channel counts.
    out = wpw[:, :, 0:1] * s2[0]
    for ci in range(1, c_in):
        out = out + wpw[:, :, ci:ci + 1] * s2[ci]
    out = out + bp_ref[...].astype(jnp.float32)   # (c_out, 1, 1) broadcast
    o_ref[...] = out[None].astype(o_ref.dtype)    # (1, c_out, th, wf): W on lanes


def rfe_conv_forward(x, w_h, b_h, w_v, b_v, w_p, b_p, *,
                     kernel_size, stride, padding, h_tile=8):
    """Pallas RfeConv forward.

    x: (N, C_in, H, W) NCHW.  Weights in PyTorch layouts:
      w_h (C_in, 1, 1, k), b_h (C_in,)      depthwise (1, k) conv
      w_v (C_in, 1, k, 1), b_v (C_in,)      depthwise (k, 1) conv
      w_p (C_out, C_in, 1, 1), b_p (C_out,) pointwise 1x1 conv
    """
    n, c_in, h, w = x.shape
    c_out = w_p.shape[0]
    k, s, p = kernel_size, stride, padding
    hf = (h + 2 * p - k) // s + 1
    wf = (w + 2 * p - k) // s + 1

    # Output-row tile: largest divisor of hf that is <= h_tile (keeps every tile
    # full so all input windows stay in bounds).  Production: raise h_tile until
    # the per-tile working set approaches the VMEM budget.
    th = max(d for d in range(1, min(h_tile, hf) + 1) if hf % d == 0)
    n_tiles = hf // th

    # Tiny weight-layout plumbing only (no full-tensor transposes or pads).
    wh = w_h.reshape(c_in, 1, k)
    wv = w_v.reshape(c_in, 1, k)
    wp = w_p.reshape(c_out, 1, c_in)
    bh = b_h.reshape(c_in, 1, 1)
    bv = b_v.reshape(c_in, 1, 1)
    bp = b_p.reshape(c_out, 1, 1)

    kern = functools.partial(_rfe_conv_kernel, k=k, s=s, p=p, h=h, w=w, th=th)
    return pl.pallas_call(
        kern,
        out_shape=jax.ShapeDtypeStruct((n, c_out, hf, wf), x.dtype),
        grid=(n, n_tiles),
        in_specs=[
            # Full plane per batch element; its block index only depends on `b`,
            # so it is DMA'd once per image and stays resident across H-tiles.
            pl.BlockSpec((1, c_in, h, w), lambda b, t: (b, 0, 0, 0)),
            pl.BlockSpec((c_in, 1, k), lambda b, t: (0, 0, 0)),
            pl.BlockSpec((c_in, 1, 1), lambda b, t: (0, 0, 0)),
            pl.BlockSpec((c_in, 1, k), lambda b, t: (0, 0, 0)),
            pl.BlockSpec((c_in, 1, 1), lambda b, t: (0, 0, 0)),
            pl.BlockSpec((c_out, 1, c_in), lambda b, t: (0, 0, 0)),
            pl.BlockSpec((c_out, 1, 1), lambda b, t: (0, 0, 0)),
        ],
        out_specs=pl.BlockSpec((1, c_out, th, wf), lambda b, t: (b, 0, t, 0)),
        scratch_shapes=[pltpu.VMEM((c_in, h + 2 * p, w + 2 * p), jnp.float32)],
        compiler_params=pltpu.CompilerParams(
            # Batch axis shards across TensorCores (v7x megacore); the H-tile axis
            # stays "arbitrary" because tiles of one image share the padded-plane
            # scratch filled at t == 0.
            dimension_semantics=("parallel", "arbitrary"),
            vmem_limit_bytes=48 * 1024 * 1024),
    )(x, wh, bh, wv, bv, wp, bp)


def rfe_conv_reference(x, w_h, b_h, w_v, b_v, w_p, b_p, *, kernel_size, stride, padding):
    """Pure-JAX reference matching the PyTorch module (bn=False, RELU_FIRST=True)."""
    del kernel_size
    c_in = x.shape[1]
    dn = ("NCHW", "OIHW", "NCHW")
    y = jnp.maximum(x, 0.0)
    y = jax.lax.conv_general_dilated(
        y, w_h, window_strides=(1, stride), padding=((0, 0), (padding, padding)),
        dimension_numbers=dn, feature_group_count=c_in) + b_h[None, :, None, None]
    y = jax.lax.conv_general_dilated(
        y, w_v, window_strides=(stride, 1), padding=((padding, padding), (0, 0)),
        dimension_numbers=dn, feature_group_count=c_in) + b_v[None, :, None, None]
    y = jax.lax.conv_general_dilated(
        y, w_p, window_strides=(1, 1), padding="VALID",
        dimension_numbers=dn) + b_p[None, :, None, None]
    return y


if __name__ == "__main__":
    key = jax.random.PRNGKey(0)
    ks = jax.random.split(key, 7)
    N, C_IN, C_OUT, H, W, K = 2, 4, 8, 16, 16, 3

    x = jax.random.normal(ks[0], (N, C_IN, H, W), jnp.float32)
    w_h = 0.3 * jax.random.normal(ks[1], (C_IN, 1, 1, K), jnp.float32)
    b_h = 0.1 * jax.random.normal(ks[2], (C_IN,), jnp.float32)
    w_v = 0.3 * jax.random.normal(ks[3], (C_IN, 1, K, 1), jnp.float32)
    b_v = 0.1 * jax.random.normal(ks[4], (C_IN,), jnp.float32)
    w_p = 0.3 * jax.random.normal(ks[5], (C_OUT, C_IN, 1, 1), jnp.float32)
    b_p = 0.1 * jax.random.normal(ks[6], (C_OUT,), jnp.float32)

    # stride == 1 (canonical RfeConv config: k=3, s=1, p=1) -> 2 H-tiles per image.
    out1 = jax.block_until_ready(
        rfe_conv_forward(x, w_h, b_h, w_v, b_v, w_p, b_p,
                         kernel_size=K, stride=1, padding=1))
    ref1 = rfe_conv_reference(x, w_h, b_h, w_v, b_v, w_p, b_p,
                              kernel_size=K, stride=1, padding=1)
    assert out1.shape == (N, C_OUT, H, W), out1.shape
    assert bool(jnp.allclose(out1, ref1, atol=2e-2, rtol=2e-2))

    # stride == 2 (spatially downsampling variant), stride applied in-kernel.
    out2 = jax.block_until_ready(
        rfe_conv_forward(x, w_h, b_h, w_v, b_v, w_p, b_p,
                         kernel_size=K, stride=2, padding=1))
    ref2 = rfe_conv_reference(x, w_h, b_h, w_v, b_v, w_p, b_p,
                              kernel_size=K, stride=2, padding=1)
    assert out2.shape == (N, C_OUT, H // 2, W // 2), out2.shape
    assert bool(jnp.allclose(out2, ref2, atol=2e-2, rtol=2e-2))

    print("KERNEL_OK")
</pallas_src>

<mosaic_0001>
module attributes {stable_mosaic.version = 11 : i64} {
  func.func @_rfe_conv_kernel(%arg0: i32, %arg1: i32, %arg2: memref<1x4x16x16xf32, #tpu.memory_space<vmem>>, %arg3: memref<4x1x3xf32, #tpu.memory_space<vmem>>, %arg4: memref<4x1x1xf32, #tpu.memory_space<vmem>>, %arg5: memref<4x1x3xf32, #tpu.memory_space<vmem>>, %arg6: memref<4x1x1xf32, #tpu.memory_space<vmem>>, %arg7: memref<8x1x4xf32, #tpu.memory_space<vmem>>, %arg8: memref<8x1x1xf32, #tpu.memory_space<vmem>>, %arg9: memref<1x8x8x16xf32, #tpu.memory_space<vmem>>, %arg10: memref<4x18x18xf32, #tpu.memory_space<vmem>>) attributes {dimension_semantics = [#tpu.dimension_semantics<parallel>, #tpu.dimension_semantics<arbitrary>], iteration_bounds = array<i64: 2, 2>, scalar_prefetch = 0 : i64, scratch_operands = 1 : i64, tpu.core_type = #tpu.core_type<tc>, window_params = [{transform_indices = @transform_0, window_bounds = array<i64: 1, 4, 16, 16>}, {pipeline_mode = #tpu.pipeline_mode<synchronous>, transform_indices = @transform_1, window_bounds = array<i64: 4, 1, 3>}, {pipeline_mode = #tpu.pipeline_mode<synchronous>, transform_indices = @transform_2, window_bounds = array<i64: 4, 1, 1>}, {pipeline_mode = #tpu.pipeline_mode<synchronous>, transform_indices = @transform_3, window_bounds = array<i64: 4, 1, 3>}, {pipeline_mode = #tpu.pipeline_mode<synchronous>, transform_indices = @transform_4, window_bounds = array<i64: 4, 1, 1>}, {pipeline_mode = #tpu.pipeline_mode<synchronous>, transform_indices = @transform_5, window_bounds = array<i64: 8, 1, 4>}, {pipeline_mode = #tpu.pipeline_mode<synchronous>, transform_indices = @transform_6, window_bounds = array<i64: 8, 1, 1>}, {transform_indices = @transform_7, window_bounds = array<i64: 1, 8, 8, 16>}]} {
    %c0_i32 = arith.constant 0 : i32
    %0 = arith.cmpi eq, %arg1, %c0_i32 : i32
    %1 = arith.extui %0 : i1 to i32
    %c0_i32_0 = arith.constant 0 : i32
    %2 = arith.cmpi ne, %1, %c0_i32_0 : i32
    scf.if %2 {
      %cst_24 = arith.constant 0.000000e+00 : f32
      %92 = vector.broadcast %cst_24 : f32 to vector<4x18x18xf32>
      %c0_25 = arith.constant 0 : index
      %c0_26 = arith.constant 0 : index
      %c0_27 = arith.constant 0 : index
      %93 = vector.load %arg10[%c0_25, %c0_26, %c0_27] : memref<4x18x18xf32, #tpu.memory_space<vmem>>, vector<4x18x18xf32>
      tpu.vector_store %arg10[%c0_25, %c0_26, %c0_27], %92 {strides = array<i32>} : memref<4x18x18xf32, #tpu.memory_space<vmem>>, vector<4x18x18xf32>,
      %c0_28 = arith.constant 0 : index
      %c0_29 = arith.constant 0 : index
      %c0_30 = arith.constant 0 : index
      %c0_31 = arith.constant 0 : index
      %94 = vector.load %arg2[%c0_28, %c0_29, %c0_30, %c0_31] : memref<1x4x16x16xf32, #tpu.memory_space<vmem>>, vector<1x4x16x16xf32>
      %95 = vector.shape_cast %94 : vector<1x4x16x16xf32> to vector<4x16x16xf32>
      %cst_32 = arith.constant 0.000000e+00 : f32
      %96 = vector.broadcast %cst_32 : f32 to vector<4x16x16xf32>
      %97 = arith.maximumf %95, %96 : vector<4x16x16xf32>
      %c0_33 = arith.constant 0 : index
      %c1 = arith.constant 1 : index
      %c1_34 = arith.constant 1 : index
      %98 = vector.load %arg10[%c0_33, %c1, %c1_34] : memref<4x18x18xf32, #tpu.memory_space<vmem>>, vector<4x16x16xf32>
      tpu.vector_store %arg10[%c0_33, %c1, %c1_34], %97 {strides = array<i32>} : memref<4x18x18xf32, #tpu.memory_space<vmem>>, vector<4x16x16xf32>,
    } else {
    }
    %c8_i32 = arith.constant 8 : i32
    %3 = arith.muli %arg1, %c8_i32 : i32
    %4 = tpu.assume_multiple %3, 8 : i32
    %c0 = arith.constant 0 : index
    %5 = arith.index_cast %4 : i32 to index
    %c0_1 = arith.constant 0 : index
    %6 = vector.load %arg10[%c0, %5, %c0_1] : memref<4x18x18xf32, #tpu.memory_space<vmem>>, vector<4x10x18xf32>
    %c0_2 = arith.constant 0 : index
    %c0_3 = arith.constant 0 : index
    %c0_4 = arith.constant 0 : index
    %7 = vector.load %arg3[%c0_2, %c0_3, %c0_4] : memref<4x1x3xf32, #tpu.memory_space<vmem>>, vector<4x1x3xf32>
    %c0_5 = arith.constant 0 : index
    %c0_6 = arith.constant 0 : index
    %c0_7 = arith.constant 0 : index
    %8 = vector.load %arg5[%c0_5, %c0_6, %c0_7] : memref<4x1x3xf32, #tpu.memory_space<vmem>>, vector<4x1x3xf32>
    %c0_8 = arith.constant 0 : index
    %c0_9 = arith.constant 0 : index
    %c0_10 = arith.constant 0 : index
    %9 = vector.load %arg7[%c0_8, %c0_9, %c0_10] : memref<8x1x4xf32, #tpu.memory_space<vmem>>, vector<8x1x4xf32>
    %10 = vector.extract_strided_slice %6 {offsets = [0, 0, 0], sizes = [4, 10, 16], strides = [1, 1, 1]} : vector<4x10x18xf32> to vector<4x10x16xf32>
    %11 = vector.extract_strided_slice %7 {offsets = [0, 0, 0], sizes = [4, 1, 1], strides = [1, 1, 1]} : vector<4x1x3xf32> to vector<4x1x1xf32>
    %12 = vector.broadcast %11 : vector<4x1x1xf32> to vector<4x10x16xf32>
    %13 = arith.mulf %10, %12 : vector<4x10x16xf32>
    %14 = vector.extract_strided_slice %6 {offsets = [0, 0, 1], sizes = [4, 10, 16], strides = [1, 1, 1]} : vector<4x10x18xf32> to vector<4x10x16xf32>
    %15 = vector.extract_strided_slice %7 {offsets = [0, 0, 1], sizes = [4, 1, 1], strides = [1, 1, 1]} : vector<4x1x3xf32> to vector<4x1x1xf32>
    %16 = vector.broadcast %15 : vector<4x1x1xf32> to vector<4x10x16xf32>
    %17 = arith.mulf %14, %16 : vector<4x10x16xf32>
    %18 = arith.addf %13, %17 : vector<4x10x16xf32>
    %19 = vector.extract_strided_slice %6 {offsets = [0, 0, 2], sizes = [4, 10, 16], strides = [1, 1, 1]} : vector<4x10x18xf32> to vector<4x10x16xf32>
    %20 = vector.extract_strided_slice %7 {offsets = [0, 0, 2], sizes = [4, 1, 1], strides = [1, 1, 1]} : vector<4x1x3xf32> to vector<4x1x1xf32>
    %21 = vector.broadcast %20 : vector<4x1x1xf32> to vector<4x10x16xf32>
    %22 = arith.mulf %19, %21 : vector<4x10x16xf32>
    %23 = arith.addf %18, %22 : vector<4x10x16xf32>
    %c0_11 = arith.constant 0 : index
    %c0_12 = arith.constant 0 : index
    %c0_13 = arith.constant 0 : index
    %24 = vector.load %arg4[%c0_11, %c0_12, %c0_13] : memref<4x1x1xf32, #tpu.memory_space<vmem>>, vector<4x1x1xf32>
    %25 = vector.broadcast %24 : vector<4x1x1xf32> to vector<4x10x16xf32>
    %26 = arith.addf %23, %25 : vector<4x10x16xf32>
    %27 = tpu.iota {dimensions = array<i32: 0>} : vector<10x1xi32>
    %28 = vector.broadcast %4 : i32 to vector<10x1xi32>
    %29 = arith.addi %28, %27 : vector<10x1xi32>
    %c1_i32 = arith.constant 1 : i32
    %30 = vector.broadcast %c1_i32 : i32 to vector<10x1xi32>
    %31 = arith.cmpi sge, %29, %30 : vector<10x1xi32>
    %c17_i32 = arith.constant 17 : i32
    %32 = vector.broadcast %c17_i32 : i32 to vector<10x1xi32>
    %33 = arith.cmpi slt, %29, %32 : vector<10x1xi32>
    %34 = arith.andi %31, %33 : vector<10x1xi1>
    %cst = arith.constant 0.000000e+00 : f32
    %35 = vector.shape_cast %34 : vector<10x1xi1> to vector<1x10x1xi1>
    %36 = vector.broadcast %35 : vector<1x10x1xi1> to vector<4x10x16xi1>
    %37 = vector.broadcast %cst : f32 to vector<4x10x16xf32>
    %38 = arith.select %36, %26, %37 : vector<4x10x16xi1>, vector<4x10x16xf32>
    %39 = vector.extract_strided_slice %38 {offsets = [0, 0, 0], sizes = [4, 8, 16], strides = [1, 1, 1]} : vector<4x10x16xf32> to vector<4x8x16xf32>
    %40 = vector.extract_strided_slice %8 {offsets = [0, 0, 0], sizes = [4, 1, 1], strides = [1, 1, 1]} : vector<4x1x3xf32> to vector<4x1x1xf32>
    %41 = vector.broadcast %40 : vector<4x1x1xf32> to vector<4x8x16xf32>
    %42 = arith.mulf %39, %41 : vector<4x8x16xf32>
    %43 = vector.extract_strided_slice %38 {offsets = [0, 1, 0], sizes = [4, 8, 16], strides = [1, 1, 1]} : vector<4x10x16xf32> to vector<4x8x16xf32>
    %44 = vector.extract_strided_slice %8 {offsets = [0, 0, 1], sizes = [4, 1, 1], strides = [1, 1, 1]} : vector<4x1x3xf32> to vector<4x1x1xf32>
    %45 = vector.broadcast %44 : vector<4x1x1xf32> to vector<4x8x16xf32>
    %46 = arith.mulf %43, %45 : vector<4x8x16xf32>
    %47 = arith.addf %42, %46 : vector<4x8x16xf32>
    %48 = vector.extract_strided_slice %38 {offsets = [0, 2, 0], sizes = [4, 8, 16], strides = [1, 1, 1]} : vector<4x10x16xf32> to vector<4x8x16xf32>
    %49 = vector.extract_strided_slice %8 {offsets = [0, 0, 2], sizes = [4, 1, 1], strides = [1, 1, 1]} : vector<4x1x3xf32> to vector<4x1x1xf32>
    %50 = vector.broadcast %49 : vector<4x1x1xf32> to vector<4x8x16xf32>
    %51 = arith.mulf %48, %50 : vector<4x8x16xf32>
    %52 = arith.addf %47, %51 : vector<4x8x16xf32>
    %c0_14 = arith.constant 0 : index
    %c0_15 = arith.constant 0 : index
    %c0_16 = arith.constant 0 : index
    %53 = vector.load %arg6[%c0_14, %c0_15, %c0_16] : memref<4x1x1xf32, #tpu.memory_space<vmem>>, vector<4x1x1xf32>
    %54 = vector.broadcast %53 : vector<4x1x1xf32> to vector<4x8x16xf32>
    %55 = arith.addf %52, %54 : vector<4x8x16xf32>
    %56 = vector.extract_strided_slice %9 {offsets = [0, 0, 0], sizes = [8, 1, 1], strides = [1, 1, 1]} : vector<8x1x4xf32> to vector<8x1x1xf32>
    %57 = vector.extract_strided_slice %55 {offsets = [0, 0, 0], sizes = [1, 8, 16], strides = [1, 1, 1]} : vector<4x8x16xf32> to vector<1x8x16xf32>
    %58 = vector.shape_cast %57 : vector<1x8x16xf32> to vector<8x16xf32>
    %59 = vector.shape_cast %58 : vector<8x16xf32> to vector<1x8x16xf32>
    %60 = vector.broadcast %56 : vector<8x1x1xf32> to vector<8x8x16xf32>
    %61 = vector.broadcast %59 : vector<1x8x16xf32> to vector<8x8x16xf32>
    %62 = arith.mulf %60, %61 : vector<8x8x16xf32>
    %63 = vector.extract_strided_slice %9 {offsets = [0, 0, 1], sizes = [8, 1, 1], strides = [1, 1, 1]} : vector<8x1x4xf32> to vector<8x1x1xf32>
    %64 = vector.extract_strided_slice %55 {offsets = [1, 0, 0], sizes = [1, 8, 16], strides = [1, 1, 1]} : vector<4x8x16xf32> to vector<1x8x16xf32>
    %65 = vector.shape_cast %64 : vector<1x8x16xf32> to vector<8x16xf32>
    %66 = vector.shape_cast %65 : vector<8x16xf32> to vector<1x8x16xf32>
    %67 = vector.broadcast %63 : vector<8x1x1xf32> to vector<8x8x16xf32>
    %68 = vector.broadcast %66 : vector<1x8x16xf32> to vector<8x8x16xf32>
    %69 = arith.mulf %67, %68 : vector<8x8x16xf32>
    %70 = arith.addf %62, %69 : vector<8x8x16xf32>
    %71 = vector.extract_strided_slice %9 {offsets = [0, 0, 2], sizes = [8, 1, 1], strides = [1, 1, 1]} : vector<8x1x4xf32> to vector<8x1x1xf32>
    %72 = vector.extract_strided_slice %55 {offsets = [2, 0, 0], sizes = [1, 8, 16], strides = [1, 1, 1]} : vector<4x8x16xf32> to vector<1x8x16xf32>
    %73 = vector.shape_cast %72 : vector<1x8x16xf32> to vector<8x16xf32>
    %74 = vector.shape_cast %73 : vector<8x16xf32> to vector<1x8x16xf32>
    %75 = vector.broadcast %71 : vector<8x1x1xf32> to vector<8x8x16xf32>
    %76 = vector.broadcast %74 : vector<1x8x16xf32> to vector<8x8x16xf32>
    %77 = arith.mulf %75, %76 : vector<8x8x16xf32>
    %78 = arith.addf %70, %77 : vector<8x8x16xf32>
    %79 = vector.extract_strided_slice %9 {offsets = [0, 0, 3], sizes = [8, 1, 1], strides = [1, 1, 1]} : vector<8x1x4xf32> to vector<8x1x1xf32>
    %80 = vector.extract_strided_slice %55 {offsets = [3, 0, 0], sizes = [1, 8, 16], strides = [1, 1, 1]} : vector<4x8x16xf32> to vector<1x8x16xf32>
    %81 = vector.shape_cast %80 : vector<1x8x16xf32> to vector<8x16xf32>
    %82 = vector.shape_cast %81 : vector<8x16xf32> to vector<1x8x16xf32>
    %83 = vector.broadcast %79 : vector<8x1x1xf32> to vector<8x8x16xf32>
    %84 = vector.broadcast %82 : vector<1x8x16xf32> to vector<8x8x16xf32>
    %85 = arith.mulf %83, %84 : vector<8x8x16xf32>
    %86 = arith.addf %78, %85 : vector<8x8x16xf32>
    %c0_17 = arith.constant 0 : index
    %c0_18 = arith.constant 0 : index
    %c0_19 = arith.constant 0 : index
    %87 = vector.load %arg8[%c0_17, %c0_18, %c0_19] : memref<8x1x1xf32, #tpu.memory_space<vmem>>, vector<8x1x1xf32>
    %88 = vector.broadcast %87 : vector<8x1x1xf32> to vector<8x8x16xf32>
    %89 = arith.addf %86, %88 : vector<8x8x16xf32>
    %90 = vector.shape_cast %89 : vector<8x8x16xf32> to vector<1x8x8x16xf32>
    %c0_20 = arith.constant 0 : index
    %c0_21 = arith.constant 0 : index
    %c0_22 = arith.constant 0 : index
    %c0_23 = arith.constant 0 : index
    %91 = vector.load %arg9[%c0_20, %c0_21, %c0_22, %c0_23] : memref<1x8x8x16xf32, #tpu.memory_space<vmem>>, vector<1x8x8x16xf32>
    tpu.vector_store %arg9[%c0_20, %c0_21, %c0_22, %c0_23], %90 {strides = array<i32>} : memref<1x8x8x16xf32, #tpu.memory_space<vmem>>, vector<1x8x8x16xf32>,
    return
  }
  func.func @transform_0(%arg0: i32, %arg1: i32) -> (i32, i32, i32, i32) {
    %c0_i32 = arith.constant 0 : i32
    %c0_i32_0 = arith.constant 0 : i32
    %c0_i32_1 = arith.constant 0 : i32
    %c0_i32_2 = arith.constant 0 : i32
    return %arg0, %c0_i32, %c0_i32_0, %c0_i32_1 : i32, i32, i32, i32
  }
  func.func @transform_1(%arg0: i32, %arg1: i32) -> (i32, i32, i32) {
    %c0_i32 = arith.constant 0 : i32
    %c0_i32_0 = arith.constant 0 : i32
    %c0_i32_1 = arith.constant 0 : i32
    %c0_i32_2 = arith.constant 0 : i32
    return %c0_i32, %c0_i32_0, %c0_i32_1 : i32, i32, i32
  }
  func.func @transform_2(%arg0: i32, %arg1: i32) -> (i32, i32, i32) {
    %c0_i32 = arith.constant 0 : i32
    %c0_i32_0 = arith.constant 0 : i32
    %c0_i32_1 = arith.constant 0 : i32
    %c0_i32_2 = arith.constant 0 : i32
    return %c0_i32, %c0_i32_0, %c0_i32_1 : i32, i32, i32
  }
  func.func @transform_3(%arg0: i32, %arg1: i32) -> (i32, i32, i32) {
    %c0_i32 = arith.constant 0 : i32
    %c0_i32_0 = arith.constant 0 : i32
    %c0_i32_1 = arith.constant 0 : i32
    %c0_i32_2 = arith.constant 0 : i32
    return %c0_i32, %c0_i32_0, %c0_i32_1 : i32, i32, i32
  }
  func.func @transform_4(%arg0: i32, %arg1: i32) -> (i32, i32, i32) {
    %c0_i32 = arith.constant 0 : i32
    %c0_i32_0 = arith.constant 0 : i32
    %c0_i32_1 = arith.constant 0 : i32
    %c0_i32_2 = arith.constant 0 : i32
    return %c0_i32, %c0_i32_0, %c0_i32_1 : i32, i32, i32
  }
  func.func @transform_5(%arg0: i32, %arg1: i32) -> (i32, i32, i32) {
    %c0_i32 = arith.constant 0 : i32
    %c0_i32_0 = arith.constant 0 : i32
    %c0_i32_1 = arith.constant 0 : i32
    %c0_i32_2 = arith.constant 0 : i32
    return %c0_i32, %c0_i32_0, %c0_i32_1 : i32, i32, i32
  }
  func.func @transform_6(%arg0: i32, %arg1: i32) -> (i32, i32, i32) {
    %c0_i32 = arith.constant 0 : i32
    %c0_i32_0 = arith.constant 0 : i32
    %c0_i32_1 = arith.constant 0 : i32
    %c0_i32_2 = arith.constant 0 : i32
    return %c0_i32, %c0_i32_0, %c0_i32_1 : i32, i32, i32
  }
  func.func @transform_7(%arg0: i32, %arg1: i32) -> (i32, i32, i32, i32) {
    %c0_i32 = arith.constant 0 : i32
    %c0_i32_0 = arith.constant 0 : i32
    %c0_i32_1 = arith.constant 0 : i32
    return %arg0, %c0_i32, %arg1, %c0_i32_0 : i32, i32, i32, i32
  }
}

</mosaic_0001>

<llo_original>
// kernel: tpu_custom_call.1
$region0: #{tpu_custom_call.1}
  #allocation0 [shape = 'u32[]', space=smem, size = 0x4, offset = 0x4, fixed_abs, tag = 'smem constant byte address 0x4 - core index']
  #allocation1 [shape = 'u32[144,128]{1,0:T(1,128)}', space=vmem, size = 0x12000, scoped, tag = 'internal scratch']
  #allocation2 [shape = 'f32[4,18,18]{2,1,0:T(8,128)}', space=vmem, size = 0xc000, scoped, tag = 'scratch operand']
  %s0 = inlined_call_operand.hbm [shape: f32[2,4,16,16], index: 0, kind: input, shape index: {}]
  %s1 = inlined_call_operand.vmem [shape: f32[4,1,3], index: 1, kind: input, shape index: {}]
  %s2 = inlined_call_operand.vmem [shape: f32[4,1,1], index: 2, kind: input, shape index: {}]
  %s3 = inlined_call_operand.vmem [shape: f32[4,1,3], index: 3, kind: input, shape index: {}]
  %s4 = inlined_call_operand.vmem [shape: f32[4,1,1], index: 4, kind: input, shape index: {}]
  %s5 = inlined_call_operand.vmem [shape: f32[8,1,4], index: 5, kind: input, shape index: {}]
  %s6 = inlined_call_operand.vmem [shape: f32[8,1,1], index: 6, kind: input, shape index: {}]
  %s7 = inlined_call_operand.hbm [shape: f32[2,8,16,16], index: 7, kind: output, shape index: {}]
  %s8 = sld [smem:[#allocation0]]
  $region69: #{tpu_custom_call.1} parent=0
    _
  %s10 = ssub.s32 1, %s8
  %s11 = scalar_select 0, %s10, %s8
  $region1: #{tpu_custom_call.1} parent=0
    #allocation3 [shape = 'u8[65536]{0}', space=vmem, size = 0x10000, scoped, tag = 'input window, operand 0']
    #allocation4 [shape = 's32[2]{0}', space=sflag, size = 0x8, scoped, tag = 'scoped memory for tpu_custom_call.1']
    #allocation5 [shape = 's32[2]{0}', space=sflag, size = 0x8, scoped, tag = 'scoped memory for tpu_custom_call.1']
    #allocation6 [shape = 'u8[65536]{0}', space=vmem, size = 0x10000, scoped, tag = 'output window, operand 0']
    %12 = vsyncpa [#allocation4], 0
    %s13 = scalar_lea.sflag [#allocation4], 1
    %14 = vsyncpa %s13, 0
    %15 = vsyncpa [#allocation5], 0
    %s16 = scalar_lea.sflag [#allocation5], 1
    %17 = vsyncpa %s16, 0
    loop: start=0, step=1, limit=6
    $region2: #{tpu_custom_call.1} parent=1 // loop_pre_header
      _
    $region3: #{tpu_custom_call.1} parent=1 // loop_header
      %s19 = sphi 0, %s23
      %p20 = scmp.ge.s32.totalorder %s19, 6
      %s26 = sphi 0, %s38
      %s27 = sphi 0, %s34
      %s28 = sphi 0, %s26
      %s29 = sphi 0, %s27
      %s30 = sphi 0, %s28
      %s31 = sphi 0, %s29
      %s41 = sphi 0, %s43
      %s44 = sphi 0, %s41
      %s45 = sphi 0, %s44
      %s61 = sphi 0, %s45
      %s65 = sphi 0, %s65
      %s67 = sphi 0, %s65
      %s68 = sphi 0, %s67
      %s82 = sphi 0, %s68
      %s86 = sphi 0, %s86
      %s88 = sphi 0, %s86
      %s89 = sphi 0, %s88
      %s103 = sphi 0, %s89
      %s107 = sphi 0, %s107
      %s109 = sphi 0, %s107
      %s110 = sphi 0, %s109
      %s124 = sphi 0, %s110
      %s128 = sphi 0, %s128
      %s130 = sphi 0, %s128
      %s131 = sphi 0, %s130
      %s145 = sphi 0, %s131
      %s149 = sphi 0, %s149
      %s151 = sphi 0, %s149
      %s152 = sphi 0, %s151
      %s166 = sphi 0, %s152
      %s170 = sphi 0, %s170
      %s172 = sphi 0, %s170
      %s173 = sphi 0, %s172
      %s187 = sphi 0, %s173
      %s195 = sphi 0, %s197
      %s198 = sphi 0, %s195
      %s199 = sphi 0, %s198
      %s215 = sphi 0, %s199
    $region4: #{tpu_custom_call.1} parent=1 // loop_header_branch
      %22 = sbr.rel (%p20) target = $region8
    $region5: #{tpu_custom_call.1} parent=1 // loop_body
      %s24 = ssub.s32 %s19, 1
      %s25 = ssub.s32 %s19, 2
      %s32 = sadd.s32 1, %s27
      %p33 = scmp.ge.s32.totalorder %s32, 2
      %s34 = scalar_select %p33, 0, %s32
      %s35 = sadd.s32 1, %s26
      %s36 = scalar_select %p33, %s35, %s26
      %p37 = scmp.ge.s32.totalorder %s36, 2
      %s38 = scalar_select %p37, 0, %s36
      %s39 = ssub.s32 %s26, %s38
      %p40 = scmp.eq.s32.totalorder %s39, 0
      %s42 = sadd.s32 %s41, 1
      %s43 = scalar_select %p40, %s41, %s42
      %p46 = pneg %p40
      %p47 = scmp.eq.s32.totalorder %s19, 3
      %p48 = por %p46, %p47
      %p49 = scmp.ne.s32.totalorder %s41, %s44
      %p50 = scmp.eq.s32.totalorder %s19, 0
      %p51 = por %p49, %p50
      %p52 = scmp.ne.s32.totalorder %s41, %s44
      %p53 = scmp.eq.s32.totalorder %s24, 3
      %p54 = por %p52, %p53
      %p55 = scmp.ne.s32.totalorder %s44, %s45
      %p56 = scmp.eq.s32.totalorder %s24, 0
      %p57 = por %p55, %p56
      %p58 = scmp.ne.s32.totalorder %s44, %s45
      %p59 = scmp.eq.s32.totalorder %s25, 3
      %p60 = por %p58, %p59
      %p62 = scmp.ne.s32.totalorder %s45, %s61
      %p63 = scmp.eq.s32.totalorder %s25, 0
      %p64 = por %p62, %p63
      %s66 = sadd.s32 %s65, 1
      %p69 = scmp.eq.s32.totalorder %s19, 3
      %p70 = scmp.ne.s32.totalorder %s65, %s67
      %p71 = scmp.eq.s32.totalorder %s19, 0
      %p72 = por %p70, %p71
      %p73 = scmp.ne.s32.totalorder %s65, %s67
      %p74 = scmp.eq.s32.totalorder %s24, 3
      %p75 = por %p73, %p74
      %p76 = scmp.ne.s32.totalorder %s67, %s68
      %p77 = scmp.eq.s32.totalorder %s24, 0
      %p78 = por %p76, %p77
      %p79 = scmp.ne.s32.totalorder %s67, %s68
      %p80 = scmp.eq.s32.totalorder %s25, 3
      %p81 = por %p79, %p80
      %p83 = scmp.ne.s32.totalorder %s68, %s82
      %p84 = scmp.eq.s32.totalorder %s25, 0
      %p85 = por %p83, %p84
      %s87 = sadd.s32 %s86, 1
      %p90 = scmp.eq.s32.totalorder %s19, 3
      %p91 = scmp.ne.s32.totalorder %s86, %s88
      %p92 = scmp.eq.s32.totalorder %s19, 0
      %p93 = por %p91, %p92
      %p94 = scmp.ne.s32.totalorder %s86, %s88
      %p95 = scmp.eq.s32.totalorder %s24, 3
      %p96 = por %p94, %p95
      %p97 = scmp.ne.s32.totalorder %s88, %s89
      %p98 = scmp.eq.s32.totalorder %s24, 0
      %p99 = por %p97, %p98
      %p100 = scmp.ne.s32.totalorder %s88, %s89
      %p101 = scmp.eq.s32.totalorder %s25, 3
      %p102 = por %p100, %p101
      %p104 = scmp.ne.s32.totalorder %s89, %s103
      %p105 = scmp.eq.s32.totalorder %s25, 0
      %p106 = por %p104, %p105
      %s108 = sadd.s32 %s107, 1
      %p111 = scmp.eq.s32.totalorder %s19, 3
      %p112 = scmp.ne.s32.totalorder %s107, %s109
      %p113 = scmp.eq.s32.totalorder %s19, 0
      %p114 = por %p112, %p113
      %p115 = scmp.ne.s32.totalorder %s107, %s109
      %p116 = scmp.eq.s32.totalorder %s24, 3
      %p117 = por %p115, %p116
      %p118 = scmp.ne.s32.totalorder %s109, %s110
      %p119 = scmp.eq.s32.totalorder %s24, 0
      %p120 = por %p118, %p119
      %p121 = scmp.ne.s32.totalorder %s109, %s110
      %p122 = scmp.eq.s32.totalorder %s25, 3
      %p123 = por %p121, %p122
      %p125 = scmp.ne.s32.totalorder %s110, %s124
      %p126 = scmp.eq.s32.totalorder %s25, 0
      %p127 = por %p125, %p126
      %s129 = sadd.s32 %s128, 1
      %p132 = scmp.eq.s32.totalorder %s19, 3
      %p133 = scmp.ne.s32.totalorder %s128, %s130
      %p134 = scmp.eq.s32.totalorder %s19, 0
      %p135 = por %p133, %p134
      %p136 = scmp.ne.s32.totalorder %s128, %s130
      %p137 = scmp.eq.s32.totalorder %s24, 3
      %p138 = por %p136, %p137
      %p139 = scmp.ne.s32.totalorder %s130, %s131
      %p140 = scmp.eq.s32.totalorder %s24, 0
      %p141 = por %p139, %p140
      %p142 = scmp.ne.s32.totalorder %s130, %s131
      %p143 = scmp.eq.s32.totalorder %s25, 3
      %p144 = por %p142, %p143
      %p146 = scmp.ne.s32.totalorder %s131, %s145
      %p147 = scmp.eq.s32.totalorder %s25, 0
      %p148 = por %p146, %p147
      %s150 = sadd.s32 %s149, 1
      %p153 = scmp.eq.s32.totalorder %s19, 3
      %p154 = scmp.ne.s32.totalorder %s149, %s151
      %p155 = scmp.eq.s32.totalorder %s19, 0
      %p156 = por %p154, %p155
      %p157 = scmp.ne.s32.totalorder %s149, %s151
      %p158 = scmp.eq.s32.totalorder %s24, 3
      %p159 = por %p157, %p158
      %p160 = scmp.ne.s32.totalorder %s151, %s152
      %p161 = scmp.eq.s32.totalorder %s24, 0
      %p162 = por %p160, %p161
      %p163 = scmp.ne.s32.totalorder %s151, %s152
      %p164 = scmp.eq.s32.totalorder %s25, 3
      %p165 = por %p163, %p164
      %p167 = scmp.ne.s32.totalorder %s152, %s166
      %p168 = scmp.eq.s32.totalorder %s25, 0
      %p169 = por %p167, %p168
      %s171 = sadd.s32 %s170, 1
      %p174 = scmp.eq.s32.totalorder %s19, 3
      %p175 = scmp.ne.s32.totalorder %s170, %s172
      %p176 = scmp.eq.s32.totalorder %s19, 0
      %p177 = por %p175, %p176
      %p178 = scmp.ne.s32.totalorder %s170, %s172
      %p179 = scmp.eq.s32.totalorder %s24, 3
      %p180 = por %p178, %p179
      %p181 = scmp.ne.s32.totalorder %s172, %s173
      %p182 = scmp.eq.s32.totalorder %s24, 0
      %p183 = por %p181, %p182
      %p184 = scmp.ne.s32.totalorder %s172, %s173
      %p185 = scmp.eq.s32.totalorder %s25, 3
      %p186 = por %p184, %p185
      %p188 = scmp.ne.s32.totalorder %s173, %s187
      %p189 = scmp.eq.s32.totalorder %s25, 0
      %p190 = por %p188, %p189
      %s191 = ssub.s32 %s26, %s38
      %s192 = ssub.s32 %s27, %s34
      %s193 = sor.u32 %s191, %s192
      %p194 = scmp.eq.s32.totalorder %s193, 0
      %s196 = sadd.s32 %s195, 1
      %s197 = scalar_select %p194, %s195, %s196
      %p200 = pneg %p194
      %p201 = scmp.eq.s32.totalorder %s19, 3
      %p202 = por %p200, %p201
      %p203 = scmp.ne.s32.totalorder %s195, %s198
      %p204 = scmp.eq.s32.totalorder %s19, 0
      %p205 = por %p203, %p204
      %p206 = scmp.ne.s32.totalorder %s195, %s198
      %p207 = scmp.eq.s32.totalorder %s24, 3
      %p208 = por %p206, %p207
      %p209 = scmp.ne.s32.totalorder %s198, %s199
      %p210 = scmp.eq.s32.totalorder %s24, 0
      %p211 = por %p209, %p210
      %p212 = scmp.ne.s32.totalorder %s198, %s199
      %p213 = scmp.eq.s32.totalorder %s25, 3
      %p214 = por %p212, %p213
      %p216 = scmp.ne.s32.totalorder %s199, %s215
      %p217 = scmp.eq.s32.totalorder %s25, 0
      %p218 = por %p216, %p217
      %p219 = scmp.le.s32.totalorder 1, %s19
      %p220 = scmp.lt.s32.totalorder %s19, 5
      %p221 = pnand %p219, %p220
      %p222 = pneg %p221
      // Predicated region
      $region9: #{tpu_custom_call.1} parent=5 // pred_check
        _
      $region10: #{tpu_custom_call.1} parent=5 // pred_check_branch
        %224 = sbr.rel (%p221) target = $region12
      $region11: #{tpu_custom_call.1} parent=5 // pred_region
        %s225 = ssub.s32 %s19, 1
        // Predicated region
        $region13: #{tpu_custom_call.1} parent=11 // pred_check
          %p226 = pneg %p78
        $region14: #{tpu_custom_call.1} parent=11 // pred_check_branch
          %228 = sbr.rel (%p226) target = $region16
        $region15: #{tpu_custom_call.1} parent=11 // pred_region
          _
        $region16: #{tpu_custom_call.1} parent=11 // pred_fallthru
          _
        // Predicated region
        $region17: #{tpu_custom_call.1} parent=11 // pred_check
          %p229 = pneg %p99
        $region18: #{tpu_custom_call.1} parent=11 // pred_check_branch
          %231 = sbr.rel (%p229) target = $region20
        $region19: #{tpu_custom_call.1} parent=11 // pred_region
          _
        $region20: #{tpu_custom_call.1} parent=11 // pred_fallthru
          _
        // Predicated region
        $region21: #{tpu_custom_call.1} parent=11 // pred_check
          %p232 = pneg %p120
        $region22: #{tpu_custom_call.1} parent=11 // pred_check_branch
          %234 = sbr.rel (%p232) target = $region24
        $region23: #{tpu_custom_call.1} parent=11 // pred_region
          _
        $region24: #{tpu_custom_call.1} parent=11 // pred_fallthru
          _
        // Predicated region
        $region25: #{tpu_custom_call.1} parent=11 // pred_check
          %p235 = pneg %p141
        $region26: #{tpu_custom_call.1} parent=11 // pred_check_branch
          %237 = sbr.rel (%p235) target = $region28
        $region27: #{tpu_custom_call.1} parent=11 // pred_region
          _
        $region28: #{tpu_custom_call.1} parent=11 // pred_fallthru
          _
        // Predicated region
        $region29: #{tpu_custom_call.1} parent=11 // pred_check
          %p238 = pneg %p162
        $region30: #{tpu_custom_call.1} parent=11 // pred_check_branch
          %240 = sbr.rel (%p238) target = $region32
        $region31: #{tpu_custom_call.1} parent=11 // pred_region
          _
        $region32: #{tpu_custom_call.1} parent=11 // pred_fallthru
          _
        // Predicated region
        $region33: #{tpu_custom_call.1} parent=11 // pred_check
          %p241 = pneg %p183
        $region34: #{tpu_custom_call.1} parent=11 // pred_check_branch
          %243 = sbr.rel (%p241) target = $region36
        $region35: #{tpu_custom_call.1} parent=11 // pred_region
          _
        $region36: #{tpu_custom_call.1} parent=11 // pred_fallthru
          _
      $region12: #{tpu_custom_call.1} parent=5 // pred_fallthru
        _
      %p244 = scmp.lt.s32.totalorder %s19, 4
      // Predicated region
      $region37: #{tpu_custom_call.1} parent=5 // pred_check
        %p245 = pneg %p244
      $region38: #{tpu_custom_call.1} parent=5 // pred_check_branch
        %247 = sbr.rel (%p245) target = $region40
      $region39: #{tpu_custom_call.1} parent=5 // pred_region
        // Predicated region
        $region41: #{tpu_custom_call.1} parent=39 // pred_check
          %p248 = pneg %p51
        $region42: #{tpu_custom_call.1} parent=39 // pred_check_branch
          %250 = sbr.rel (%p248) target = $region44
        $region43: #{tpu_custom_call.1} parent=39 // pred_region
          %s251 = sand.u32 %s41, 1
          %s252 = scalar_lea.sflag [#allocation4], %s251
          %s253 = sand.u32 %s41, 1
          %s254 = smul.addr %s253, 64
          %s255 = scalar_lea.vmem [#allocation3], %s254
          %s257 = ssub.s32 1024, 1024
          %258 = vsyncadd %s252, %s257
          %s259 = smul.addr %s26, 8
          %s260 = smul.addr %s259, 128
          %s261 = scalar_lea.hbm %s0, %s260
          %s262 = sshll.u32 %s255, 4
          %s263 = int_to_ptr.vmem [resolvable:$true] %s262
          %268 = dma.hbm_to_vmem [thread:$0]  %s261, 1024, %s263, %s252, 128, 128, 8
        $region44: #{tpu_custom_call.1} parent=39 // pred_fallthru
          _
      $region40: #{tpu_custom_call.1} parent=5 // pred_fallthru
        _
      %p269 = scmp.le.s32.totalorder 1, %s19
      %p270 = scmp.lt.s32.totalorder %s19, 5
      %p271 = pnand %p269, %p270
      %p272 = pneg %p271
      // Predicated region
      $region45: #{tpu_custom_call.1} parent=5 // pred_check
        _
      $region46: #{tpu_custom_call.1} parent=5 // pred_check_branch
        %274 = sbr.rel (%p271) target = $region48
      $region47: #{tpu_custom_call.1} parent=5 // pred_region
        %s275 = ssub.s32 %s19, 1
        %s276 = sand.u32 %s44, 1
        %s277 = scalar_lea.sflag [#allocation4], %s276
        %s278 = sand.u32 %s44, 1
        %s279 = smul.addr %s278, 64
        %s280 = scalar_lea.vmem [#allocation3], %s279
        // Predicated region
        $region49: #{tpu_custom_call.1} parent=47 // pred_check
          %p281 = pneg %p57
        $region50: #{tpu_custom_call.1} parent=47 // pred_check_branch
          %283 = sbr.rel (%p281) target = $region52
        $region51: #{tpu_custom_call.1} parent=47 // pred_region
          %284 = dma.done %s277, 1024
        $region52: #{tpu_custom_call.1} parent=47 // pred_fallthru
          _
        %s285 = sand.u32 %s44, 1
        %s286 = scalar_lea.sflag [#allocation4], %s285
        %s287 = sand.u32 %s44, 1
        %s288 = smul.addr %s287, 64
        %s289 = scalar_lea.vmem [#allocation3], %s288
        %p290 = pneg %p57
        %p291 = pneg %p54
        %p292 = pneg %p78
        %p293 = pneg %p75
        %p294 = pneg %p99
        %p295 = pneg %p96
        %p296 = pneg %p120
        %p297 = pneg %p117
        %p298 = pneg %p141
        %p299 = pneg %p138
        %p300 = pneg %p162
        %p301 = pneg %p159
        %p302 = pneg %p183
        %p303 = pneg %p180
        %p304 = pneg %p211
        %p305 = pneg %p208
        %s306 = sand.u32 %s198, 1
        %s307 = scalar_lea.sflag [#allocation5], %s306
        %s308 = sand.u32 %s198, 1
        %s309 = smul.addr %s308, 64
        %s310 = scalar_lea.vmem [#allocation6], %s309
        %p311 = scmp.eq.s32.totalorder %s29, 0
        // Predicated region
        $region53: #{tpu_custom_call.1} parent=47 // pred_check
          %p312 = pneg %p311
        $region54: #{tpu_custom_call.1} parent=47 // pred_check_branch
          %314 = sbr.rel (%p312) target = $region56
        $region55: #{tpu_custom_call.1} parent=47 // pred_region
          %vm315 = vcmask 146432
          %316 = vst.msk [vmem:[#allocation2] sm:$0xff] %vm315, 0.0
          %317 = vst.msk [vmem:[#allocation2 + $0x8] sm:$0xff] %vm315, 0.0
          %vm318 = vcmask 140288
          %319 = vst.msk [vmem:[#allocation2 + $0x10] sm:$0x3] %vm318, 0.0
          %320 = vst.msk [vmem:[#allocation2 + $0x18] sm:$0xff] %vm315, 0.0
          %321 = vst.msk [vmem:[#allocation2 + $0x20] sm:$0xff] %vm315, 0.0
          %322 = vst.msk [vmem:[#allocation2 + $0x28] sm:$0x3] %vm318, 0.0
          %323 = vst.msk [vmem:[#allocation2 + $0x30] sm:$0xff] %vm315, 0.0
          %324 = vst.msk [vmem:[#allocation2 + $0x38] sm:$0xff] %vm315, 0.0
          %325 = vst.msk [vmem:[#allocation2 + $0x40] sm:$0x3] %vm318, 0.0
          %326 = vst.msk [vmem:[#allocation2 + $0x48] sm:$0xff] %vm315, 0.0
          %327 = vst.msk [vmem:[#allocation2 + $0x50] sm:$0xff] %vm315, 0.0
          %328 = vst.msk [vmem:[#allocation2 + $0x58] sm:$0x3] %vm318, 0.0
          %v329 = vld [vmem:[%s280] sm:$0xff]
          %v330 = vld [vmem:[%s280 + $0x8] sm:$0xff]
          %v331 = vld [vmem:[%s280 + $0x10] sm:$0xff]
          %v332 = vld [vmem:[%s280 + $0x18] sm:$0xff]
          %v333 = vld [vmem:[%s280 + $0x20] sm:$0xff]
          %v334 = vld [vmem:[%s280 + $0x28] sm:$0xff]
          %v335 = vld [vmem:[%s280 + $0x30] sm:$0xff]
          %v336 = vld [vmem:[%s280 + $0x38] sm:$0xff]
          %v337 = vmax.f32 %v329, 0.0
          %v338 = vmax.f32 %v330, 0.0
          %v339 = vmax.f32 %v331, 0.0
          %v340 = vmax.f32 %v332, 0.0
          %v341 = vmax.f32 %v333, 0.0
          %v342 = vmax.f32 %v334, 0.0
          %v343 = vmax.f32 %v335, 0.0
          %v344 = vmax.f32 %v336, 0.0
          %353 = vrot.lane.b32.xlu0 %v337, 1
          %v354 = vpop.permute.xlu0 %353
          %355 = vrot.lane.b32.xlu0 %v338, 1
          %v356 = vpop.permute.xlu0 %355
          %357 = vrot.lane.b32.xlu0 %v339, 1
          %v358 = vpop.permute.xlu0 %357
          %359 = vrot.lane.b32.xlu0 %v340, 1
          %v360 = vpop.permute.xlu0 %359
          %361 = vrot.lane.b32.xlu0 %v341, 1
          %v362 = vpop.permute.xlu0 %361
          %363 = vrot.lane.b32.xlu0 %v342, 1
          %v364 = vpop.permute.xlu0 %363
          %365 = vrot.lane.b32.xlu0 %v343, 1
          %v366 = vpop.permute.xlu0 %365
          %367 = vrot.lane.b32.xlu0 %v344, 1
          %v368 = vpop.permute.xlu0 %367
          %vm377 = vcmask 138248
          %378 = vst.msk [vmem:[#allocation2 + $0x1] sm:$0xff] %vm377, %v354
          %379 = vst.msk [vmem:[#allocation2 + $0x9] sm:$0xff] %vm377, %v356
          %380 = vst.msk [vmem:[#allocation2 + $0x19] sm:$0xff] %vm377, %v358
          %381 = vst.msk [vmem:[#allocation2 + $0x21] sm:$0xff] %vm377, %v360
          %382 = vst.msk [vmem:[#allocation2 + $0x31] sm:$0xff] %vm377, %v362
          %383 = vst.msk [vmem:[#allocation2 + $0x39] sm:$0xff] %vm377, %v364
          %384 = vst.msk [vmem:[#allocation2 + $0x49] sm:$0xff] %vm377, %v366
          %385 = vst.msk [vmem:[#allocation2 + $0x51] sm:$0xff] %vm377, %v368
        $region56: #{tpu_custom_call.1} parent=47 // pred_fallthru
          _
        %s386 = smul.u32 %s29, 8
        %s387 = scalar_lea.vmem [#allocation2], %s386
        %v388 = vld [vmem:[%s387] sm:$0xff]
        %v389 = vld [vmem:[%s387 + $0x8] sm:$0x3]
        %v390 = vld [vmem:[%s387 + $0x18] sm:$0xff]
        %v391 = vld [vmem:[%s387 + $0x20] sm:$0x3]
        %v392 = vld [vmem:[%s387 + $0x30] sm:$0xff]
        %v393 = vld [vmem:[%s387 + $0x38] sm:$0x3]
        %v394 = vld [vmem:[%s387 + $0x48] sm:$0xff]
        %v395 = vld [vmem:[%s387 + $0x50] sm:$0x3]
        %v396 = vld [vmem:[%s1] sm:$0x1]
        %v397 = vld [vmem:[%s1 + $0x1] sm:$0x1]
        %v398 = vld [vmem:[%s1 + $0x2] sm:$0x1]
        %v399 = vld [vmem:[%s1 + $0x3] sm:$0x1]
        %v400 = vld [vmem:[%s3] sm:$0x1]
        %v401 = vld [vmem:[%s3 + $0x1] sm:$0x1]
        %v402 = vld [vmem:[%s3 + $0x2] sm:$0x1]
        %v403 = vld [vmem:[%s3 + $0x3] sm:$0x1]
        %v404 = vld [vmem:[%s5] sm:$0x1]
        %v405 = vld [vmem:[%s5 + $0x1] sm:$0x1]
        %v406 = vld [vmem:[%s5 + $0x2] sm:$0x1]
        %v407 = vld [vmem:[%s5 + $0x3] sm:$0x1]
        %v408 = vld [vmem:[%s5 + $0x4] sm:$0x1]
        %v409 = vld [vmem:[%s5 + $0x5] sm:$0x1]
        %v410 = vld [vmem:[%s5 + $0x6] sm:$0x1]
        %v411 = vld [vmem:[%s5 + $0x7] sm:$0x1]
        %v416 = vlaneseq
        %v417 = vshrl.u32 %v416, 7
        %v418 = vsub.s32 0, %v417
        %v419 = vrot.slane %v396, %v418
        %v420 = vlaneseq
        %v421 = vshrl.u32 %v420, 7
        %v422 = vsub.s32 0, %v421
        %v423 = vrot.slane %v397, %v422
        %v424 = vlaneseq
        %v425 = vshrl.u32 %v424, 7
        %v426 = vsub.s32 0, %v425
        %v427 = vrot.slane %v398, %v426
        %v428 = vlaneseq
        %v429 = vshrl.u32 %v428, 7
        %v430 = vsub.s32 0, %v429
        %v431 = vrot.slane %v399, %v430
        %432 = vset.pattern.permute.xlu0 0
        %433 = vperm.xlu0 %432, %v419
        %v434 = vpop.permute.xlu0 %433
        %436 = vset.pattern.permute.xlu0 0
        %437 = vperm.xlu0 %436, %v423
        %v438 = vpop.permute.xlu0 %437
        %440 = vset.pattern.permute.xlu0 0
        %441 = vperm.xlu0 %440, %v427
        %v442 = vpop.permute.xlu0 %441
        %444 = vset.pattern.permute.xlu0 0
        %445 = vperm.xlu0 %444, %v431
        %v446 = vpop.permute.xlu0 %445
        %v448 = vmul.f32 %v388, %v434
        %v449 = vmul.f32 %v389, %v434
        %v450 = vmul.f32 %v390, %v438
        %v451 = vmul.f32 %v391, %v438
        %v452 = vmul.f32 %v392, %v442
        %v453 = vmul.f32 %v393, %v442
        %v454 = vmul.f32 %v394, %v446
        %v455 = vmul.f32 %v395, %v446
        %456 = vset.pattern.permute.xlu0 1
        %457 = vperm.xlu0 %456, %v419
        %v458 = vpop.permute.xlu0 %457
        %460 = vset.pattern.permute.xlu0 1
        %461 = vperm.xlu0 %460, %v423
        %v462 = vpop.permute.xlu0 %461
        %464 = vset.pattern.permute.xlu0 1
        %465 = vperm.xlu0 %464, %v427
        %v466 = vpop.permute.xlu0 %465
        %468 = vset.pattern.permute.xlu0 1
        %469 = vperm.xlu0 %468, %v431
        %v470 = vpop.permute.xlu0 %469
        %v472 = vmul.f32 %v388, %v458
        %v473 = vmul.f32 %v389, %v458
        %v474 = vmul.f32 %v390, %v462
        %v475 = vmul.f32 %v391, %v462
        %v476 = vmul.f32 %v392, %v466
        %v477 = vmul.f32 %v393, %v466
        %v478 = vmul.f32 %v394, %v470
        %v479 = vmul.f32 %v395, %v470
        %488 = vrot.lane.b32.xlu0 %v472, 127
        %v489 = vpop.permute.xlu0 %488
        %490 = vrot.lane.b32.xlu0 %v473, 127
        %v491 = vpop.permute.xlu0 %490
        %492 = vrot.lane.b32.xlu0 %v474, 127
        %v493 = vpop.permute.xlu0 %492
        %494 = vrot.lane.b32.xlu0 %v475, 127
        %v495 = vpop.permute.xlu0 %494
        %496 = vrot.lane.b32.xlu0 %v476, 127
        %v497 = vpop.permute.xlu0 %496
        %498 = vrot.lane.b32.xlu0 %v477, 127
        %v499 = vpop.permute.xlu0 %498
        %500 = vrot.lane.b32.xlu0 %v478, 127
        %v501 = vpop.permute.xlu0 %500
        %502 = vrot.lane.b32.xlu0 %v479, 127
        %v503 = vpop.permute.xlu0 %502
        %v512 = vadd.f32 %v448, %v489
        %v513 = vadd.f32 %v449, %v491
        %v514 = vadd.f32 %v450, %v493
        %v515 = vadd.f32 %v451, %v495
        %v516 = vadd.f32 %v452, %v497
        %v517 = vadd.f32 %v453, %v499
        %v518 = vadd.f32 %v454, %v501
        %v519 = vadd.f32 %v455, %v503
        %520 = vset.pattern.permute.xlu0 2
        %521 = vperm.xlu0 %520, %v419
        %v522 = vpop.permute.xlu0 %521
        %524 = vset.pattern.permute.xlu0 2
        %525 = vperm.xlu0 %524, %v423
        %v526 = vpop.permute.xlu0 %525
        %528 = vset.pattern.permute.xlu0 2
        %529 = vperm.xlu0 %528, %v427
        %v530 = vpop.permute.xlu0 %529
        %532 = vset.pattern.permute.xlu0 2
        %533 = vperm.xlu0 %532, %v431
        %v534 = vpop.permute.xlu0 %533
        %v536 = vmul.f32 %v388, %v522
        %v537 = vmul.f32 %v389, %v522
        %v538 = vmul.f32 %v390, %v526
        %v539 = vmul.f32 %v391, %v526
        %v540 = vmul.f32 %v392, %v530
        %v541 = vmul.f32 %v393, %v530
        %v542 = vmul.f32 %v394, %v534
        %v543 = vmul.f32 %v395, %v534
        %552 = vrot.lane.b32.xlu0 %v536, 126
        %v553 = vpop.permute.xlu0 %552
        %554 = vrot.lane.b32.xlu0 %v537, 126
        %v555 = vpop.permute.xlu0 %554
        %556 = vrot.lane.b32.xlu0 %v538, 126
        %v557 = vpop.permute.xlu0 %556
        %558 = vrot.lane.b32.xlu0 %v539, 126
        %v559 = vpop.permute.xlu0 %558
        %560 = vrot.lane.b32.xlu0 %v540, 126
        %v561 = vpop.permute.xlu0 %560
        %562 = vrot.lane.b32.xlu0 %v541, 126
        %v563 = vpop.permute.xlu0 %562
        %564 = vrot.lane.b32.xlu0 %v542, 126
        %v565 = vpop.permute.xlu0 %564
        %566 = vrot.lane.b32.xlu0 %v543, 126
        %v567 = vpop.permute.xlu0 %566
        %v576 = vadd.f32 %v512, %v553
        %v577 = vadd.f32 %v513, %v555
        %v578 = vadd.f32 %v514, %v557
        %v579 = vadd.f32 %v515, %v559
        %v580 = vadd.f32 %v516, %v561
        %v581 = vadd.f32 %v517, %v563
        %v582 = vadd.f32 %v518, %v565
        %v583 = vadd.f32 %v519, %v567
        %v584 = vld [vmem:[%s2] sm:$0x1]
        %v585 = vld [vmem:[%s2 + $0x1] sm:$0x1]
        %v586 = vld [vmem:[%s2 + $0x2] sm:$0x1]
        %v587 = vld [vmem:[%s2 + $0x3] sm:$0x1]
        %v592 = vlaneseq
        %v593 = vshrl.u32 %v592, 7
        %v594 = vsub.s32 0, %v593
        %v595 = vrot.slane %v584, %v594
        %v596 = vlaneseq
        %v597 = vshrl.u32 %v596, 7
        %v598 = vsub.s32 0, %v597
        %v599 = vrot.slane %v585, %v598
        %v600 = vlaneseq
        %v601 = vshrl.u32 %v600, 7
        %v602 = vsub.s32 0, %v601
        %v603 = vrot.slane %v586, %v602
        %v604 = vlaneseq
        %v605 = vshrl.u32 %v604, 7
        %v606 = vsub.s32 0, %v605
        %v607 = vrot.slane %v587, %v606
        %608 = vset.pattern.permute.xlu0 0
        %609 = vperm.xlu0 %608, %v595
        %v610 = vpop.permute.xlu0 %609
        %612 = vset.pattern.permute.xlu0 0
        %613 = vperm.xlu0 %612, %v599
        %v614 = vpop.permute.xlu0 %613
        %616 = vset.pattern.permute.xlu0 0
        %617 = vperm.xlu0 %616, %v603
        %v618 = vpop.permute.xlu0 %617
        %620 = vset.pattern.permute.xlu0 0
        %621 = vperm.xlu0 %620, %v607
        %v622 = vpop.permute.xlu0 %621
        %v624 = vadd.f32 %v576, %v610
        %v625 = vadd.f32 %v577, %v610
        %v626 = vadd.f32 %v578, %v614
        %v627 = vadd.f32 %v579, %v614
        %v628 = vadd.f32 %v580, %v618
        %v629 = vadd.f32 %v581, %v618
        %v630 = vadd.f32 %v582, %v622
        %v631 = vadd.f32 %v583, %v622
        %v632 = vlaneseq
        %v633 = vshrl.u32 %v632, 7
        %v634 = vadd.s32 %v633, 8
        %v635 = vstv %s386
        %v636 = vadd.s32 %v635, %v633
        %v637 = vadd.s32 %v635, %v634
        %vm638 = vcmp.ge.s32.totalorder %v636, 1
        %vm639 = vcmp.ge.s32.totalorder %v637, 1
        %vm640 = vcmp.lt.s32.totalorder %v636, 17
        %vm641 = vcmp.lt.s32.totalorder %v637, 17
        %vm642 = vmand %vm638, %vm640
        %vm643 = vmand %vm639, %vm641
        %v644 = vsel %vm642, 1, 0
        %v645 = vsel %vm643, 1, 0
        %vm646 = vcmp.eq.s32.totalorder %v644, 1
        %vm647 = vcmp.eq.s32.totalorder %v645, 1
        %v648 = vsel %vm646, %v624, 0.0
        %v649 = vsel %vm647, %v625, 0.0
        %v650 = vsel %vm646, %v626, 0.0
        %v651 = vsel %vm647, %v627, 0.0
        %v652 = vsel %vm646, %v628, 0.0
        %v653 = vsel %vm647, %v629, 0.0
        %v654 = vsel %vm646, %v630, 0.0
        %v655 = vsel %vm647, %v631, 0.0
        %v660 = vlaneseq
        %v661 = vshrl.u32 %v660, 7
        %v662 = vsub.s32 0, %v661
        %v663 = vrot.slane %v400, %v662
        %v664 = vlaneseq
        %v665 = vshrl.u32 %v664, 7
        %v666 = vsub.s32 0, %v665
        %v667 = vrot.slane %v401, %v666
        %v668 = vlaneseq
        %v669 = vshrl.u32 %v668, 7
        %v670 = vsub.s32 0, %v669
        %v671 = vrot.slane %v402, %v670
        %v672 = vlaneseq
        %v673 = vshrl.u32 %v672, 7
        %v674 = vsub.s32 0, %v673
        %v675 = vrot.slane %v403, %v674
        %676 = vset.pattern.permute.xlu0 0
        %677 = vperm.xlu0 %676, %v663
        %v678 = vpop.permute.xlu0 %677
        %680 = vset.pattern.permute.xlu0 0
        %681 = vperm.xlu0 %680, %v667
        %v682 = vpop.permute.xlu0 %681
        %684 = vset.pattern.permute.xlu0 0
        %685 = vperm.xlu0 %684, %v671
        %v686 = vpop.permute.xlu0 %685
        %688 = vset.pattern.permute.xlu0 0
        %689 = vperm.xlu0 %688, %v675
        %v690 = vpop.permute.xlu0 %689
        %v692 = vmul.f32 %v648, %v678
        %v693 = vmul.f32 %v650, %v682
        %v694 = vmul.f32 %v652, %v686
        %v695 = vmul.f32 %v654, %v690
        %696 = vset.pattern.permute.xlu0 1
        %697 = vperm.xlu0 %696, %v663
        %v698 = vpop.permute.xlu0 %697
        %700 = vset.pattern.permute.xlu0 1
        %701 = vperm.xlu0 %700, %v667
        %v702 = vpop.permute.xlu0 %701
        %704 = vset.pattern.permute.xlu0 1
        %705 = vperm.xlu0 %704, %v671
        %v706 = vpop.permute.xlu0 %705
        %708 = vset.pattern.permute.xlu0 1
        %709 = vperm.xlu0 %708, %v675
        %v710 = vpop.permute.xlu0 %709
        %v712 = vmul.f32 %v648, %v698
        %v713 = vmul.f32 %v649, %v698
        %v714 = vmul.f32 %v650, %v702
        %v715 = vmul.f32 %v651, %v702
        %v716 = vmul.f32 %v652, %v706
        %v717 = vmul.f32 %v653, %v706
        %v718 = vmul.f32 %v654, %v710
        %v719 = vmul.f32 %v655, %v710
        %vm728 = vcmask 1046528
        %v729 = vrot.slane %v712, 1
        %v730 = vrot.slane %v713, 1
        %v731 = vsel %vm728, %v729, %v730
        %v732 = vrot.slane %v714, 1
        %v733 = vrot.slane %v715, 1
        %v734 = vsel %vm728, %v732, %v733
        %v735 = vrot.slane %v716, 1
        %v736 = vrot.slane %v717, 1
        %v737 = vsel %vm728, %v735, %v736
        %v738 = vrot.slane %v718, 1
        %v739 = vrot.slane %v719, 1
        %v740 = vsel %vm728, %v738, %v739
        %v745 = vadd.f32 %v692, %v731
        %v746 = vadd.f32 %v693, %v734
        %v747 = vadd.f32 %v694, %v737
        %v748 = vadd.f32 %v695, %v740
        %749 = vset.pattern.permute.xlu0 2
        %750 = vperm.xlu0 %749, %v663
        %v751 = vpop.permute.xlu0 %750
        %753 = vset.pattern.permute.xlu0 2
        %754 = vperm.xlu0 %753, %v667
        %v755 = vpop.permute.xlu0 %754
        %757 = vset.pattern.permute.xlu0 2
        %758 = vperm.xlu0 %757, %v671
        %v759 = vpop.permute.xlu0 %758
        %761 = vset.pattern.permute.xlu0 2
        %762 = vperm.xlu0 %761, %v675
        %v763 = vpop.permute.xlu0 %762
        %v765 = vmul.f32 %v648, %v751
        %v766 = vmul.f32 %v649, %v751
        %v767 = vmul.f32 %v650, %v755
        %v768 = vmul.f32 %v651, %v755
        %v769 = vmul.f32 %v652, %v759
        %v770 = vmul.f32 %v653, %v759
        %v771 = vmul.f32 %v654, %v763
        %v772 = vmul.f32 %v655, %v763
        %vm781 = vcmask 1045504
        %v782 = vrot.slane %v765, 2
        %v783 = vrot.slane %v766, 2
        %v784 = vsel %vm781, %v782, %v783
        %v785 = vrot.slane %v767, 2
        %v786 = vrot.slane %v768, 2
        %v787 = vsel %vm781, %v785, %v786
        %v788 = vrot.slane %v769, 2
        %v789 = vrot.slane %v770, 2
        %v790 = vsel %vm781, %v788, %v789
        %v791 = vrot.slane %v771, 2
        %v792 = vrot.slane %v772, 2
        %v793 = vsel %vm781, %v791, %v792
        %v798 = vadd.f32 %v745, %v784
        %v799 = vadd.f32 %v746, %v787
        %v800 = vadd.f32 %v747, %v790
        %v801 = vadd.f32 %v748, %v793
        %v802 = vld [vmem:[%s4] sm:$0x1]
        %v803 = vld [vmem:[%s4 + $0x1] sm:$0x1]
        %v804 = vld [vmem:[%s4 + $0x2] sm:$0x1]
        %v805 = vld [vmem:[%s4 + $0x3] sm:$0x1]
        %v810 = vlaneseq
        %v811 = vshrl.u32 %v810, 7
        %v812 = vsub.s32 0, %v811
        %v813 = vrot.slane %v802, %v812
        %v814 = vlaneseq
        %v815 = vshrl.u32 %v814, 7
        %v816 = vsub.s32 0, %v815
        %v817 = vrot.slane %v803, %v816
        %v818 = vlaneseq
        %v819 = vshrl.u32 %v818, 7
        %v820 = vsub.s32 0, %v819
        %v821 = vrot.slane %v804, %v820
        %v822 = vlaneseq
        %v823 = vshrl.u32 %v822, 7
        %v824 = vsub.s32 0, %v823
        %v825 = vrot.slane %v805, %v824
        %826 = vset.pattern.permute.xlu0 0
        %827 = vperm.xlu0 %826, %v813
        %v828 = vpop.permute.xlu0 %827
        %830 = vset.pattern.permute.xlu0 0
        %831 = vperm.xlu0 %830, %v817
        %v832 = vpop.permute.xlu0 %831
        %834 = vset.pattern.permute.xlu0 0
        %835 = vperm.xlu0 %834, %v821
        %v836 = vpop.permute.xlu0 %835
        %838 = vset.pattern.permute.xlu0 0
        %839 = vperm.xlu0 %838, %v825
        %v840 = vpop.permute.xlu0 %839
        %v842 = vadd.f32 %v798, %v828
        %v843 = vadd.f32 %v799, %v832
        %v844 = vadd.f32 %v800, %v836
        %v845 = vadd.f32 %v801, %v840
        %v854 = vlaneseq
        %v855 = vshrl.u32 %v854, 7
        %v856 = vsub.s32 0, %v855
        %v857 = vrot.slane %v404, %v856
        %v858 = vlaneseq
        %v859 = vshrl.u32 %v858, 7
        %v860 = vsub.s32 0, %v859
        %v861 = vrot.slane %v405, %v860
        %v862 = vlaneseq
        %v863 = vshrl.u32 %v862, 7
        %v864 = vsub.s32 0, %v863
        %v865 = vrot.slane %v406, %v864
        %v866 = vlaneseq
        %v867 = vshrl.u32 %v866, 7
        %v868 = vsub.s32 0, %v867
        %v869 = vrot.slane %v407, %v868
        %v870 = vlaneseq
        %v871 = vshrl.u32 %v870, 7
        %v872 = vsub.s32 0, %v871
        %v873 = vrot.slane %v408, %v872
        %v874 = vlaneseq
        %v875 = vshrl.u32 %v874, 7
        %v876 = vsub.s32 0, %v875
        %v877 = vrot.slane %v409, %v876
        %v878 = vlaneseq
        %v879 = vshrl.u32 %v878, 7
        %v880 = vsub.s32 0, %v879
        %v881 = vrot.slane %v410, %v880
        %v882 = vlaneseq
        %v883 = vshrl.u32 %v882, 7
        %v884 = vsub.s32 0, %v883
        %v885 = vrot.slane %v411, %v884
        %886 = vset.pattern.permute.xlu0 0
        %887 = vperm.xlu0 %886, %v857
        %v888 = vpop.permute.xlu0 %887
        %890 = vset.pattern.permute.xlu0 0
        %891 = vperm.xlu0 %890, %v861
        %v892 = vpop.permute.xlu0 %891
        %894 = vset.pattern.permute.xlu0 0
        %895 = vperm.xlu0 %894, %v865
        %v896 = vpop.permute.xlu0 %895
        %898 = vset.pattern.permute.xlu0 0
        %899 = vperm.xlu0 %898, %v869
        %v900 = vpop.permute.xlu0 %899
        %902 = vset.pattern.permute.xlu0 0
        %903 = vperm.xlu0 %902, %v873
        %v904 = vpop.permute.xlu0 %903
        %906 = vset.pattern.permute.xlu0 0
        %907 = vperm.xlu0 %906, %v877
        %v908 = vpop.permute.xlu0 %907
        %910 = vset.pattern.permute.xlu0 0
        %911 = vperm.xlu0 %910, %v881
        %v912 = vpop.permute.xlu0 %911
        %914 = vset.pattern.permute.xlu0 0
        %915 = vperm.xlu0 %914, %v885
        %v916 = vpop.permute.xlu0 %915
        %v918 = vmul.f32 %v888, %v842
        %v919 = vmul.f32 %v892, %v842
        %v920 = vmul.f32 %v896, %v842
        %v921 = vmul.f32 %v900, %v842
        %v922 = vmul.f32 %v904, %v842
        %v923 = vmul.f32 %v908, %v842
        %v924 = vmul.f32 %v912, %v842
        %v925 = vmul.f32 %v916, %v842
        %926 = vset.pattern.permute.xlu0 1
        %927 = vperm.xlu0 %926, %v857
        %v928 = vpop.permute.xlu0 %927
        %930 = vset.pattern.permute.xlu0 1
        %931 = vperm.xlu0 %930, %v861
        %v932 = vpop.permute.xlu0 %931
        %934 = vset.pattern.permute.xlu0 1
        %935 = vperm.xlu0 %934, %v865
        %v936 = vpop.permute.xlu0 %935
        %938 = vset.pattern.permute.xlu0 1
        %939 = vperm.xlu0 %938, %v869
        %v940 = vpop.permute.xlu0 %939
        %942 = vset.pattern.permute.xlu0 1
        %943 = vperm.xlu0 %942, %v873
        %v944 = vpop.permute.xlu0 %943
        %946 = vset.pattern.permute.xlu0 1
        %947 = vperm.xlu0 %946, %v877
        %v948 = vpop.permute.xlu0 %947
        %950 = vset.pattern.permute.xlu0 1
        %951 = vperm.xlu0 %950, %v881
        %v952 = vpop.permute.xlu0 %951
        %954 = vset.pattern.permute.xlu0 1
        %955 = vperm.xlu0 %954, %v885
        %v956 = vpop.permute.xlu0 %955
        %v958 = vmul.f32 %v928, %v843
        %v959 = vmul.f32 %v932, %v843
        %v960 = vmul.f32 %v936, %v843
        %v961 = vmul.f32 %v940, %v843
        %v962 = vmul.f32 %v944, %v843
        %v963 = vmul.f32 %v948, %v843
        %v964 = vmul.f32 %v952, %v843
        %v965 = vmul.f32 %v956, %v843
        %v966 = vadd.f32 %v918, %v958
        %v967 = vadd.f32 %v919, %v959
        %v968 = vadd.f32 %v920, %v960
        %v969 = vadd.f32 %v921, %v961
        %v970 = vadd.f32 %v922, %v962
        %v971 = vadd.f32 %v923, %v963
        %v972 = vadd.f32 %v924, %v964
        %v973 = vadd.f32 %v925, %v965
        %974 = vset.pattern.permute.xlu0 2
        %975 = vperm.xlu0 %974, %v857
        %v976 = vpop.permute.xlu0 %975
        %978 = vset.pattern.permute.xlu0 2
        %979 = vperm.xlu0 %978, %v861
        %v980 = vpop.permute.xlu0 %979
        %982 = vset.pattern.permute.xlu0 2
        %983 = vperm.xlu0 %982, %v865
        %v984 = vpop.permute.xlu0 %983
        %986 = vset.pattern.permute.xlu0 2
        %987 = vperm.xlu0 %986, %v869
        %v988 = vpop.permute.xlu0 %987
        %990 = vset.pattern.permute.xlu0 2
        %991 = vperm.xlu0 %990, %v873
        %v992 = vpop.permute.xlu0 %991
        %994 = vset.pattern.permute.xlu0 2
        %995 = vperm.xlu0 %994, %v877
        %v996 = vpop.permute.xlu0 %995
        %998 = vset.pattern.permute.xlu0 2
        %999 = vperm.xlu0 %998, %v881
        %v1000 = vpop.permute.xlu0 %999
        %1002 = vset.pattern.permute.xlu0 2
        %1003 = vperm.xlu0 %1002, %v885
        %v1004 = vpop.permute.xlu0 %1003
        %v1006 = vmul.f32 %v976, %v844
        %v1007 = vmul.f32 %v980, %v844
        %v1008 = vmul.f32 %v984, %v844
        %v1009 = vmul.f32 %v988, %v844
        %v1010 = vmul.f32 %v992, %v844
        %v1011 = vmul.f32 %v996, %v844
        %v1012 = vmul.f32 %v1000, %v844
        %v1013 = vmul.f32 %v1004, %v844
        %v1014 = vadd.f32 %v966, %v1006
        %v1015 = vadd.f32 %v967, %v1007
        %v1016 = vadd.f32 %v968, %v1008
        %v1017 = vadd.f32 %v969, %v1009
        %v1018 = vadd.f32 %v970, %v1010
        %v1019 = vadd.f32 %v971, %v1011
        %v1020 = vadd.f32 %v972, %v1012
        %v1021 = vadd.f32 %v973, %v1013
        %1022 = vset.pattern.permute.xlu0 3
        %1023 = vperm.xlu0 %1022, %v857
        %v1024 = vpop.permute.xlu0 %1023
        %1026 = vset.pattern.permute.xlu0 3
        %1027 = vperm.xlu0 %1026, %v861
        %v1028 = vpop.permute.xlu0 %1027
        %1030 = vset.pattern.permute.xlu0 3
        %1031 = vperm.xlu0 %1030, %v865
        %v1032 = vpop.permute.xlu0 %1031
        %1034 = vset.pattern.permute.xlu0 3
        %1035 = vperm.xlu0 %1034, %v869
        %v1036 = vpop.permute.xlu0 %1035
        %1038 = vset.pattern.permute.xlu0 3
        %1039 = vperm.xlu0 %1038, %v873
        %v1040 = vpop.permute.xlu0 %1039
        %1042 = vset.pattern.permute.xlu0 3
        %1043 = vperm.xlu0 %1042, %v877
        %v1044 = vpop.permute.xlu0 %1043
        %1046 = vset.pattern.permute.xlu0 3
        %1047 = vperm.xlu0 %1046, %v881
        %v1048 = vpop.permute.xlu0 %1047
        %1050 = vset.pattern.permute.xlu0 3
        %1051 = vperm.xlu0 %1050, %v885
        %v1052 = vpop.permute.xlu0 %1051
        %v1054 = vmul.f32 %v1024, %v845
        %v1055 = vmul.f32 %v1028, %v845
        %v1056 = vmul.f32 %v1032, %v845
        %v1057 = vmul.f32 %v1036, %v845
        %v1058 = vmul.f32 %v1040, %v845
        %v1059 = vmul.f32 %v1044, %v845
        %v1060 = vmul.f32 %v1048, %v845
        %v1061 = vmul.f32 %v1052, %v845
        %v1062 = vadd.f32 %v1014, %v1054
        %v1063 = vadd.f32 %v1015, %v1055
        %v1064 = vadd.f32 %v1016, %v1056
        %v1065 = vadd.f32 %v1017, %v1057
        %v1066 = vadd.f32 %v1018, %v1058
        %v1067 = vadd.f32 %v1019, %v1059
        %v1068 = vadd.f32 %v1020, %v1060
        %v1069 = vadd.f32 %v1021, %v1061
        %v1070 = vld [vmem:[%s6] sm:$0x1]
        %v1071 = vld [vmem:[%s6 + $0x1] sm:$0x1]
        %v1072 = vld [vmem:[%s6 + $0x2] sm:$0x1]
        %v1073 = vld [vmem:[%s6 + $0x3] sm:$0x1]
        %v1074 = vld [vmem:[%s6 + $0x4] sm:$0x1]
        %v1075 = vld [vmem:[%s6 + $0x5] sm:$0x1]
        %v1076 = vld [vmem:[%s6 + $0x6] sm:$0x1]
        %v1077 = vld [vmem:[%s6 + $0x7] sm:$0x1]
        %v1086 = vlaneseq
        %v1087 = vshrl.u32 %v1086, 7
        %v1088 = vsub.s32 0, %v1087
        %v1089 = vrot.slane %v1070, %v1088
        %v1090 = vlaneseq
        %v1091 = vshrl.u32 %v1090, 7
        %v1092 = vsub.s32 0, %v1091
        %v1093 = vrot.slane %v1071, %v1092
        %v1094 = vlaneseq
        %v1095 = vshrl.u32 %v1094, 7
        %v1096 = vsub.s32 0, %v1095
        %v1097 = vrot.slane %v1072, %v1096
        %v1098 = vlaneseq
        %v1099 = vshrl.u32 %v1098, 7
        %v1100 = vsub.s32 0, %v1099
        %v1101 = vrot.slane %v1073, %v1100
        %v1102 = vlaneseq
        %v1103 = vshrl.u32 %v1102, 7
        %v1104 = vsub.s32 0, %v1103
        %v1105 = vrot.slane %v1074, %v1104
        %v1106 = vlaneseq
        %v1107 = vshrl.u32 %v1106, 7
        %v1108 = vsub.s32 0, %v1107
        %v1109 = vrot.slane %v1075, %v1108
        %v1110 = vlaneseq
        %v1111 = vshrl.u32 %v1110, 7
        %v1112 = vsub.s32 0, %v1111
        %v1113 = vrot.slane %v1076, %v1112
        %v1114 = vlaneseq
        %v1115 = vshrl.u32 %v1114, 7
        %v1116 = vsub.s32 0, %v1115
        %v1117 = vrot.slane %v1077, %v1116
        %1118 = vset.pattern.permute.xlu0 0
        %1119 = vperm.xlu0 %1118, %v1089
        %v1120 = vpop.permute.xlu0 %1119
        %1122 = vset.pattern.permute.xlu0 0
        %1123 = vperm.xlu0 %1122, %v1093
        %v1124 = vpop.permute.xlu0 %1123
        %1126 = vset.pattern.permute.xlu0 0
        %1127 = vperm.xlu0 %1126, %v1097
        %v1128 = vpop.permute.xlu0 %1127
        %1130 = vset.pattern.permute.xlu0 0
        %1131 = vperm.xlu0 %1130, %v1101
        %v1132 = vpop.permute.xlu0 %1131
        %1134 = vset.pattern.permute.xlu0 0
        %1135 = vperm.xlu0 %1134, %v1105
        %v1136 = vpop.permute.xlu0 %1135
        %1138 = vset.pattern.permute.xlu0 0
        %1139 = vperm.xlu0 %1138, %v1109
        %v1140 = vpop.permute.xlu0 %1139
        %1142 = vset.pattern.permute.xlu0 0
        %1143 = vperm.xlu0 %1142, %v1113
        %v1144 = vpop.permute.xlu0 %1143
        %1146 = vset.pattern.permute.xlu0 0
        %1147 = vperm.xlu0 %1146, %v1117
        %v1148 = vpop.permute.xlu0 %1147
        %v1150 = vadd.f32 %v1062, %v1120
        %v1151 = vadd.f32 %v1063, %v1124
        %v1152 = vadd.f32 %v1064, %v1128
        %v1153 = vadd.f32 %v1065, %v1132
        %v1154 = vadd.f32 %v1066, %v1136
        %v1155 = vadd.f32 %v1067, %v1140
        %v1156 = vadd.f32 %v1068, %v1144
        %v1157 = vadd.f32 %v1069, %v1148
        %vm1158 = vcmask 130048
        %1159 = vst.msk [vmem:[%s310] sm:$0xff] %vm1158, %v1150
        %1160 = vst.msk [vmem:[%s310 + $0x8] sm:$0xff] %vm1158, %v1151
        %1161 = vst.msk [vmem:[%s310 + $0x10] sm:$0xff] %vm1158, %v1152
        %1162 = vst.msk [vmem:[%s310 + $0x18] sm:$0xff] %vm1158, %v1153
        %1163 = vst.msk [vmem:[%s310 + $0x20] sm:$0xff] %vm1158, %v1154
        %1164 = vst.msk [vmem:[%s310 + $0x28] sm:$0xff] %vm1158, %v1155
        %1165 = vst.msk [vmem:[%s310 + $0x30] sm:$0xff] %vm1158, %v1156
        %1166 = vst.msk [vmem:[%s310 + $0x38] sm:$0xff] %vm1158, %v1157
        %s1167 = sand.u32 %s198, 1
        %s1168 = scalar_lea.sflag [#allocation5], %s1167
        %s1169 = sand.u32 %s198, 1
        %s1170 = smul.addr %s1169, 64
        %s1171 = scalar_lea.vmem [#allocation6], %s1170
        // Predicated region
        $region57: #{tpu_custom_call.1} parent=47 // pred_check
          %p1172 = pneg %p208
        $region58: #{tpu_custom_call.1} parent=47 // pred_check_branch
          %1174 = sbr.rel (%p1172) target = $region60
        $region59: #{tpu_custom_call.1} parent=47 // pred_region
          %s1176 = ssub.s32 1024, 1024
          %1177 = vsyncadd %s1168, %s1176
          %s1178 = smul.addr %s28, 16
          %s1179 = sadd.s32 %s29, %s1178
          %s1180 = smul.addr %s1179, 128
          %s1181 = scalar_lea.hbm %s7, %s1180
          %s1182 = sshll.u32 %s1171, 4
          %s1183 = int_to_ptr.vmem [resolvable:$true] %s1182
          %1188 = dma.vmem_to_hbm [thread:$0]  %s1183, 1024, %s1181, %s1168, 128, 256, 8
        $region60: #{tpu_custom_call.1} parent=47 // pred_fallthru
          _
      $region48: #{tpu_custom_call.1} parent=5 // pred_fallthru
        _
      %p1189 = scmp.le.s32.totalorder 2, %s19
      // Predicated region
      $region61: #{tpu_custom_call.1} parent=5 // pred_check
        %p1190 = pneg %p1189
      $region62: #{tpu_custom_call.1} parent=5 // pred_check_branch
        %1192 = sbr.rel (%p1190) target = $region64
      $region63: #{tpu_custom_call.1} parent=5 // pred_region
        %s1193 = ssub.s32 %s19, 2
        // Predicated region
        $region65: #{tpu_custom_call.1} parent=63 // pred_check
          %p1194 = pneg %p214
        $region66: #{tpu_custom_call.1} parent=63 // pred_check_branch
          %1196 = sbr.rel (%p1194) target = $region68
        $region67: #{tpu_custom_call.1} parent=63 // pred_region
          %s1197 = sand.u32 %s199, 1
          %s1198 = scalar_lea.sflag [#allocation5], %s1197
          %s1199 = sand.u32 %s199, 1
          %s1200 = smul.addr %s1199, 64
          %s1201 = scalar_lea.vmem [#allocation6], %s1200
          %1202 = dma.done %s1198, 1024
        $region68: #{tpu_custom_call.1} parent=63 // pred_fallthru
          _
      $region64: #{tpu_custom_call.1} parent=5 // pred_fallthru
        _
    $region6: #{tpu_custom_call.1} parent=1 // loop_footer
      %s23 = sadd.s32 1, %s19
    $region7: #{tpu_custom_call.1} parent=1 // loop_footer_branch
      %18 = sbr.rel target = $region3
    $region8: #{tpu_custom_call.1} parent=1 // loop_exit
      _
    %1203 = vsyncpa [#allocation4], 1
    %s1204 = scalar_lea.sflag [#allocation4], 1
    %1205 = vsyncpa %s1204, 1
    %1206 = vsyncpa [#allocation5], 1
    %s1207 = scalar_lea.sflag [#allocation5], 1
    %1208 = vsyncpa %s1207, 1

</llo_original>
